<compile_context>
chip_gen: v7x
topology: tpu7x:2x2x1
jax: 0.10.0
libtpu: 0.0.40
codegen_flags: <defaults>
</compile_context>

<pallas_src>
import functools

import jax
import jax.numpy as jnp
from jax import lax
from jax.experimental import pallas as pl
from jax.experimental.pallas import tpu as pltpu


def mha_kernel(q_ref, k_ref, w_qv_ref, w_k_ref, wo_ref, b_ref, out_ref, ctx_ref,
               *, n_batch, seq_q, seq_k):
    # q_ref : (n_batch*seq_q, D) f32   -- query rows (also used as value)
    # k_ref : (n_batch*seq_k, D) f32   -- key rows
    # w_qv_ref: (D, 2*H*D) bf16  [Q columns | V columns], head-major
    # w_k_ref : (D,   H*D) bf16
    # wo_ref  : (H*D,   D) bf16
    # b_ref   : (1, 3*H*D + D) f32 = [b_q (HD) | b_v (HD) | b_k (HD) | b_o (D)]
    # out_ref : (n_batch*seq_q, D) f32
    # ctx_ref : (n_batch*seq_q, H*D) bf16 VMEM scratch (per-head contexts)
    D = q_ref.shape[1]
    HD = w_k_ref.shape[1]
    H = HD // D

    b_qv = b_ref[:, : 2 * HD]            # (1, 2*HD)  Q|V biases
    b_k = b_ref[:, 2 * HD: 3 * HD]       # (1, HD)    K biases
    b_o = b_ref[:, 3 * HD:]              # (1, D)     output Linear bias

    # Two wide projection matmuls (no in-kernel concat, no wasted cross terms).
    qv = jnp.dot(q_ref[...].astype(jnp.bfloat16), w_qv_ref[...],
                 preferred_element_type=jnp.float32) + b_qv      # (nB*Lq, 2*HD)
    kk = jnp.dot(k_ref[...].astype(jnp.bfloat16), w_k_ref[...],
                 preferred_element_type=jnp.float32) + b_k       # (nB*Lk, HD)

    # Single cast of the projections; per-head slices stay bf16 for the MXU.
    qv_bf = qv.astype(jnp.bfloat16)
    kk_bf = kk.astype(jnp.bfloat16)

    scale = 1.0 / (float(D) ** 0.5)

    # n_batch and H are small compile-time constants: fully unrolled.
    for b in range(n_batch):
        q0 = b * seq_q
        k0 = b * seq_k
        for h in range(H):
            qh = qv_bf[q0:q0 + seq_q, h * D:(h + 1) * D]              # (Lq, D)
            vh = qv_bf[q0:q0 + seq_q, HD + h * D: HD + (h + 1) * D]   # (Lq, D)
            kh = kk_bf[k0:k0 + seq_k, h * D:(h + 1) * D]              # (Lk, D)

            # Contract last dims directly -> no kh.T transpose on the XLU.
            s = lax.dot_general(qh, kh, (((1,), (1,)), ((), ())),
                                preferred_element_type=jnp.float32) * scale
            m = jnp.max(s, axis=-1, keepdims=True)
            e = jnp.exp(s - m)
            inv = pl.reciprocal(jnp.sum(e, axis=-1, keepdims=True), approx=True)
            p = (e * inv).astype(jnp.bfloat16)

            # Write this head's context into its lane slice of the shared buffer.
            ctx_ref[q0:q0 + seq_q, h * D:(h + 1) * D] = jnp.dot(
                p, vh, preferred_element_type=jnp.float32).astype(jnp.bfloat16)

    # concat-over-heads + final Linear == one (nB*Lq, H*D) @ (H*D, D) matmul.
    out = jnp.dot(ctx_ref[...], wo_ref[...],
                  preferred_element_type=jnp.float32) + b_o
    out_ref[...] = out.astype(out_ref.dtype)


def _fuse_heads(w):
    """(H, D_in, D_out) -> (D_in, H*D_out), head-major along the output columns."""
    H, Din, Dout = w.shape
    return jnp.transpose(w, (1, 0, 2)).reshape(Din, H * Dout)


def prepare_params(params):
    """One-time weight fusion (hoisted out of the per-call path)."""
    wq, bq, wk, bk, wv, bv, wo, bo = params
    H, D, _ = wq.shape
    HD = H * D
    w_qv = jnp.concatenate([_fuse_heads(wq), _fuse_heads(wv)],
                           axis=1).astype(jnp.bfloat16)           # (D, 2*HD)
    w_k = _fuse_heads(wk).astype(jnp.bfloat16)                    # (D, HD)
    wo_full = wo.reshape(HD, D).astype(jnp.bfloat16)              # (HD, D)
    b_all = jnp.concatenate(
        [bq.reshape(1, HD), bv.reshape(1, HD), bk.reshape(1, HD),
         bo.reshape(1, D)], axis=1).astype(jnp.float32)           # (1, 3*HD + D)
    return w_qv, w_k, wo_full, b_all


def _num_batch_blocks(B):
    """2 batch-blocks on multi-TensorCore chips (v7x/v4/v5p) so both TCs get work;
    fully collapsed (1 block) on single-TC chips (v5e/v6e)."""
    try:
        kind = jax.devices()[0].device_kind.lower()
    except Exception:
        kind = ""
    multi_tc = any(m in kind for m in ("v7", "7x", "v4", "v5p"))
    return 2 if (multi_tc and B >= 2 and B % 2 == 0) else 1


def multi_head_attention(query, key, delta_t, fused_params):
    # delta_t is accepted but unused — identical to the PyTorch forward.
    del delta_t
    w_qv, w_k, wo_full, b_all = fused_params
    B, Lq, D = query.shape
    _, Lk, _ = key.shape
    HD = w_k.shape[1]

    num_blocks = _num_batch_blocks(B)
    Bblk = B // num_blocks

    # Free, contiguous reshapes: (B, L, D) -> (num_blocks, Bblk*L, D).
    q3 = query.reshape(num_blocks, Bblk * Lq, D)
    k3 = key.reshape(num_blocks, Bblk * Lk, D)

    kernel = functools.partial(mha_kernel, n_batch=Bblk, seq_q=Lq, seq_k=Lk)

    out = pl.pallas_call(
        kernel,
        out_shape=jax.ShapeDtypeStruct((num_blocks, Bblk * Lq, D), jnp.float32),
        grid_spec=pltpu.PrefetchScalarGridSpec(
            num_scalar_prefetch=0,
            grid=(num_blocks,),
            in_specs=[
                pl.BlockSpec((pl.Squeezed(), Bblk * Lq, D), lambda g: (g, 0, 0)),  # query(=value)
                pl.BlockSpec((pl.Squeezed(), Bblk * Lk, D), lambda g: (g, 0, 0)),  # key
                pl.BlockSpec((D, 2 * HD), lambda g: (0, 0)),   # fused W_q|W_v (resident)
                pl.BlockSpec((D, HD), lambda g: (0, 0)),       # fused W_k (resident)
                pl.BlockSpec((HD, D), lambda g: (0, 0)),       # Wo (resident)
                pl.BlockSpec((1, 3 * HD + D), lambda g: (0, 0)),  # packed biases
            ],
            out_specs=pl.BlockSpec((pl.Squeezed(), Bblk * Lq, D), lambda g: (g, 0, 0)),
            scratch_shapes=[pltpu.VMEM((Bblk * Lq, HD), jnp.bfloat16)],
        ),
        compiler_params=pltpu.CompilerParams(
            dimension_semantics=("parallel",)),
    )(q3, k3, w_qv, w_k, wo_full, b_all)

    return out.reshape(B, Lq, D)


def reference_mha(query, key, params):
    """Pure-JAX f32 reference reproducing the PyTorch forward."""
    wq, bq, wk, bk, wv, bv, wo, bo = params
    H, D, _ = wq.shape
    value = query
    heads = []
    for h in range(H):
        qh = query @ wq[h] + bq[h, 0]
        kh = key @ wk[h] + bk[h, 0]
        vh = value @ wv[h] + bv[h, 0]
        scores = jnp.einsum("bqd,bkd->bqk", qh, kh) / jnp.sqrt(jnp.float32(D))
        p = jax.nn.softmax(scores, axis=-1)
        heads.append(jnp.einsum("bqk,bkd->bqd", p, vh))
    cat = jnp.concatenate(heads, axis=-1)                      # (B, Lq, H*D)
    wo_full = wo.reshape(H * D, D)
    return cat @ wo_full + bo[0]


if __name__ == "__main__":
    B, H, D, Lq, Lk = 2, 2, 32, 8, 8

    key0 = jax.random.PRNGKey(0)
    ks = jax.random.split(key0, 12)
    s = 0.1
    wq = s * jax.random.normal(ks[0], (H, D, D), jnp.float32)
    bq = s * jax.random.normal(ks[1], (H, 1, D), jnp.float32)
    wk = s * jax.random.normal(ks[2], (H, D, D), jnp.float32)
    bk = s * jax.random.normal(ks[3], (H, 1, D), jnp.float32)
    wv = s * jax.random.normal(ks[4], (H, D, D), jnp.float32)
    bv = s * jax.random.normal(ks[5], (H, 1, D), jnp.float32)
    wo = s * jax.random.normal(ks[6], (H, D, D), jnp.float32)   # (H*D, D) Linear viewed per-head
    bo = s * jax.random.normal(ks[7], (1, D), jnp.float32)
    params = (wq, bq, wk, bk, wv, bv, wo, bo)

    # One-time fusion (in a real model this is cached, not redone per call).
    fused = prepare_params(params)

    query = jax.random.normal(ks[8], (B, Lq, D), jnp.float32)
    key_in = jax.random.normal(ks[9], (B, Lk, D), jnp.float32)
    delta_t = jax.random.normal(ks[10], (B, Lq, 1), jnp.float32)  # unused, mirrors signature

    out = multi_head_attention(query, key_in, delta_t, fused)
    out = jax.block_until_ready(out)

    ref = reference_mha(query, key_in, params)
    assert out.shape == (B, Lq, D)
    # bf16 MXU inputs (f32 accumulation) + approx reciprocal -> loosened tolerance.
    assert jnp.allclose(out, ref, atol=3e-2, rtol=3e-2), float(jnp.max(jnp.abs(out - ref)))

    print("KERNEL_OK")
</pallas_src>

<mosaic_0001>
module attributes {stable_mosaic.version = 11 : i64} {
  func.func @mha_kernel(%arg0: i32, %arg1: memref<1x16x32xf32, #tpu.memory_space<vmem>>, %arg2: memref<1x16x32xf32, #tpu.memory_space<vmem>>, %arg3: memref<32x128xbf16, #tpu.memory_space<vmem>>, %arg4: memref<32x64xbf16, #tpu.memory_space<vmem>>, %arg5: memref<64x32xbf16, #tpu.memory_space<vmem>>, %arg6: memref<1x224xf32, #tpu.memory_space<vmem>>, %arg7: memref<1x16x32xf32, #tpu.memory_space<vmem>>, %arg8: memref<16x64xbf16, #tpu.memory_space<vmem>>) attributes {dimension_semantics = [#tpu.dimension_semantics<parallel>], iteration_bounds = array<i64: 1>, scalar_prefetch = 0 : i64, scratch_operands = 1 : i64, tpu.core_type = #tpu.core_type<tc>, window_params = [{transform_indices = @transform_0, window_bounds = array<i64: 1, 16, 32>}, {transform_indices = @transform_1, window_bounds = array<i64: 1, 16, 32>}, {pipeline_mode = #tpu.pipeline_mode<synchronous>, transform_indices = @transform_2, window_bounds = array<i64: 32, 128>}, {pipeline_mode = #tpu.pipeline_mode<synchronous>, transform_indices = @transform_3, window_bounds = array<i64: 32, 64>}, {pipeline_mode = #tpu.pipeline_mode<synchronous>, transform_indices = @transform_4, window_bounds = array<i64: 64, 32>}, {pipeline_mode = #tpu.pipeline_mode<synchronous>, transform_indices = @transform_5, window_bounds = array<i64: 1, 224>}, {transform_indices = @transform_6, window_bounds = array<i64: 1, 16, 32>}]} {
    %c0 = arith.constant 0 : index
    %c0_0 = arith.constant 0 : index
    %0 = vector.load %arg6[%c0, %c0_0] : memref<1x224xf32, #tpu.memory_space<vmem>>, vector<1x128xf32>
    %c0_1 = arith.constant 0 : index
    %c128 = arith.constant 128 : index
    %1 = vector.load %arg6[%c0_1, %c128] : memref<1x224xf32, #tpu.memory_space<vmem>>, vector<1x64xf32>
    %c0_2 = arith.constant 0 : index
    %c192 = arith.constant 192 : index
    %2 = vector.load %arg6[%c0_2, %c192] : memref<1x224xf32, #tpu.memory_space<vmem>>, vector<1x32xf32>
    %c0_3 = arith.constant 0 : index
    %c0_4 = arith.constant 0 : index
    %c0_5 = arith.constant 0 : index
    %3 = vector.load %arg1[%c0_3, %c0_4, %c0_5] : memref<1x16x32xf32, #tpu.memory_space<vmem>>, vector<1x16x32xf32>
    %4 = vector.shape_cast %3 : vector<1x16x32xf32> to vector<16x32xf32>
    %5 = arith.truncf %4 : vector<16x32xf32> to vector<16x32xbf16>
    %c0_6 = arith.constant 0 : index
    %c0_7 = arith.constant 0 : index
    %6 = vector.load %arg3[%c0_6, %c0_7] : memref<32x128xbf16, #tpu.memory_space<vmem>>, vector<32x128xbf16>
    %cst = arith.constant dense<0.000000e+00> : vector<16x128xf32>
    %7 = tpu.matmul %5, %6, %cst {dimension_numbers = #tpu.dot_dimension_numbers<[1], [0], [0], [1], [0, 0, 1, 1], [], []>} : vector<16x32xbf16>, vector<32x128xbf16>, vector<16x128xf32> -> vector<16x128xf32>
    %8 = vector.broadcast %0 : vector<1x128xf32> to vector<16x128xf32>
    %9 = arith.addf %7, %8 : vector<16x128xf32>
    %c0_8 = arith.constant 0 : index
    %c0_9 = arith.constant 0 : index
    %c0_10 = arith.constant 0 : index
    %10 = vector.load %arg2[%c0_8, %c0_9, %c0_10] : memref<1x16x32xf32, #tpu.memory_space<vmem>>, vector<1x16x32xf32>
    %11 = vector.shape_cast %10 : vector<1x16x32xf32> to vector<16x32xf32>
    %12 = arith.truncf %11 : vector<16x32xf32> to vector<16x32xbf16>
    %c0_11 = arith.constant 0 : index
    %c0_12 = arith.constant 0 : index
    %13 = vector.load %arg4[%c0_11, %c0_12] : memref<32x64xbf16, #tpu.memory_space<vmem>>, vector<32x64xbf16>
    %cst_13 = arith.constant dense<0.000000e+00> : vector<16x64xf32>
    %14 = tpu.matmul %12, %13, %cst_13 {dimension_numbers = #tpu.dot_dimension_numbers<[1], [0], [0], [1], [0, 0, 1, 1], [], []>} : vector<16x32xbf16>, vector<32x64xbf16>, vector<16x64xf32> -> vector<16x64xf32>
    %15 = vector.broadcast %1 : vector<1x64xf32> to vector<16x64xf32>
    %16 = arith.addf %14, %15 : vector<16x64xf32>
    %17 = arith.truncf %9 : vector<16x128xf32> to vector<16x128xbf16>
    %18 = arith.truncf %16 : vector<16x64xf32> to vector<16x64xbf16>
    %19 = vector.extract_strided_slice %17 {offsets = [0, 0], sizes = [8, 32], strides = [1, 1]} : vector<16x128xbf16> to vector<8x32xbf16>
    %20 = vector.extract_strided_slice %17 {offsets = [0, 64], sizes = [8, 32], strides = [1, 1]} : vector<16x128xbf16> to vector<8x32xbf16>
    %21 = vector.extract_strided_slice %18 {offsets = [0, 0], sizes = [8, 32], strides = [1, 1]} : vector<16x64xbf16> to vector<8x32xbf16>
    %cst_14 = arith.constant dense<0.000000e+00> : vector<8x8xf32>
    %22 = tpu.matmul %19, %21, %cst_14 {dimension_numbers = #tpu.dot_dimension_numbers<[1], [1], [0], [0], [0, 0, 1, 0], [], []>} : vector<8x32xbf16>, vector<8x32xbf16>, vector<8x8xf32> -> vector<8x8xf32>
    %cst_15 = arith.constant 0.176776692 : f32
    %23 = vector.broadcast %cst_15 : f32 to vector<8x8xf32>
    %24 = arith.mulf %22, %23 : vector<8x8xf32>
    %cst_16 = arith.constant dense<0xFF800000> : vector<8xf32>
    %25 = vector.multi_reduction <maximumf>, %24, %cst_16 [1] : vector<8x8xf32> to vector<8xf32>
    %26 = vector.shape_cast %25 : vector<8xf32> to vector<8x1xf32>
    %27 = vector.broadcast %26 : vector<8x1xf32> to vector<8x8xf32>
    %28 = arith.subf %24, %27 : vector<8x8xf32>
    %29 = math.exp %28 : vector<8x8xf32>
    %cst_17 = arith.constant dense<0.000000e+00> : vector<8xf32>
    %30 = vector.multi_reduction <add>, %29, %cst_17 [1] : vector<8x8xf32> to vector<8xf32>
    %31 = vector.shape_cast %30 : vector<8xf32> to vector<8x1xf32>
    %32 = tpu.reciprocal %31 {approx = true} : vector<8x1xf32> -> vector<8x1xf32>
    %33 = vector.broadcast %32 : vector<8x1xf32> to vector<8x8xf32>
    %34 = arith.mulf %29, %33 : vector<8x8xf32>
    %35 = arith.truncf %34 : vector<8x8xf32> to vector<8x8xbf16>
    %cst_18 = arith.constant dense<0.000000e+00> : vector<8x32xf32>
    %36 = tpu.matmul %35, %20, %cst_18 {dimension_numbers = #tpu.dot_dimension_numbers<[1], [0], [0], [1], [0, 0, 1, 1], [], []>} : vector<8x8xbf16>, vector<8x32xbf16>, vector<8x32xf32> -> vector<8x32xf32>
    %37 = arith.truncf %36 : vector<8x32xf32> to vector<8x32xbf16>
    %c0_19 = arith.constant 0 : index
    %c0_20 = arith.constant 0 : index
    %38 = vector.load %arg8[%c0_19, %c0_20] : memref<16x64xbf16, #tpu.memory_space<vmem>>, vector<8x32xbf16>
    tpu.vector_store %arg8[%c0_19, %c0_20], %37 {strides = array<i32>} : memref<16x64xbf16, #tpu.memory_space<vmem>>, vector<8x32xbf16>,
    %39 = vector.extract_strided_slice %17 {offsets = [0, 32], sizes = [8, 32], strides = [1, 1]} : vector<16x128xbf16> to vector<8x32xbf16>
    %40 = vector.extract_strided_slice %17 {offsets = [0, 96], sizes = [8, 32], strides = [1, 1]} : vector<16x128xbf16> to vector<8x32xbf16>
    %41 = vector.extract_strided_slice %18 {offsets = [0, 32], sizes = [8, 32], strides = [1, 1]} : vector<16x64xbf16> to vector<8x32xbf16>
    %cst_21 = arith.constant dense<0.000000e+00> : vector<8x8xf32>
    %42 = tpu.matmul %39, %41, %cst_21 {dimension_numbers = #tpu.dot_dimension_numbers<[1], [1], [0], [0], [0, 0, 1, 0], [], []>} : vector<8x32xbf16>, vector<8x32xbf16>, vector<8x8xf32> -> vector<8x8xf32>
    %cst_22 = arith.constant 0.176776692 : f32
    %43 = vector.broadcast %cst_22 : f32 to vector<8x8xf32>
    %44 = arith.mulf %42, %43 : vector<8x8xf32>
    %cst_23 = arith.constant dense<0xFF800000> : vector<8xf32>
    %45 = vector.multi_reduction <maximumf>, %44, %cst_23 [1] : vector<8x8xf32> to vector<8xf32>
    %46 = vector.shape_cast %45 : vector<8xf32> to vector<8x1xf32>
    %47 = vector.broadcast %46 : vector<8x1xf32> to vector<8x8xf32>
    %48 = arith.subf %44, %47 : vector<8x8xf32>
    %49 = math.exp %48 : vector<8x8xf32>
    %cst_24 = arith.constant dense<0.000000e+00> : vector<8xf32>
    %50 = vector.multi_reduction <add>, %49, %cst_24 [1] : vector<8x8xf32> to vector<8xf32>
    %51 = vector.shape_cast %50 : vector<8xf32> to vector<8x1xf32>
    %52 = tpu.reciprocal %51 {approx = true} : vector<8x1xf32> -> vector<8x1xf32>
    %53 = vector.broadcast %52 : vector<8x1xf32> to vector<8x8xf32>
    %54 = arith.mulf %49, %53 : vector<8x8xf32>
    %55 = arith.truncf %54 : vector<8x8xf32> to vector<8x8xbf16>
    %cst_25 = arith.constant dense<0.000000e+00> : vector<8x32xf32>
    %56 = tpu.matmul %55, %40, %cst_25 {dimension_numbers = #tpu.dot_dimension_numbers<[1], [0], [0], [1], [0, 0, 1, 1], [], []>} : vector<8x8xbf16>, vector<8x32xbf16>, vector<8x32xf32> -> vector<8x32xf32>
    %57 = arith.truncf %56 : vector<8x32xf32> to vector<8x32xbf16>
    %c0_26 = arith.constant 0 : index
    %c32 = arith.constant 32 : index
    %58 = vector.load %arg8[%c0_26, %c32] : memref<16x64xbf16, #tpu.memory_space<vmem>>, vector<8x32xbf16>
    tpu.vector_store %arg8[%c0_26, %c32], %57 {strides = array<i32>} : memref<16x64xbf16, #tpu.memory_space<vmem>>, vector<8x32xbf16>,
    %59 = vector.extract_strided_slice %17 {offsets = [8, 0], sizes = [8, 32], strides = [1, 1]} : vector<16x128xbf16> to vector<8x32xbf16>
    %60 = vector.extract_strided_slice %17 {offsets = [8, 64], sizes = [8, 32], strides = [1, 1]} : vector<16x128xbf16> to vector<8x32xbf16>
    %61 = vector.extract_strided_slice %18 {offsets = [8, 0], sizes = [8, 32], strides = [1, 1]} : vector<16x64xbf16> to vector<8x32xbf16>
    %cst_27 = arith.constant dense<0.000000e+00> : vector<8x8xf32>
    %62 = tpu.matmul %59, %61, %cst_27 {dimension_numbers = #tpu.dot_dimension_numbers<[1], [1], [0], [0], [0, 0, 1, 0], [], []>} : vector<8x32xbf16>, vector<8x32xbf16>, vector<8x8xf32> -> vector<8x8xf32>
    %cst_28 = arith.constant 0.176776692 : f32
    %63 = vector.broadcast %cst_28 : f32 to vector<8x8xf32>
    %64 = arith.mulf %62, %63 : vector<8x8xf32>
    %cst_29 = arith.constant dense<0xFF800000> : vector<8xf32>
    %65 = vector.multi_reduction <maximumf>, %64, %cst_29 [1] : vector<8x8xf32> to vector<8xf32>
    %66 = vector.shape_cast %65 : vector<8xf32> to vector<8x1xf32>
    %67 = vector.broadcast %66 : vector<8x1xf32> to vector<8x8xf32>
    %68 = arith.subf %64, %67 : vector<8x8xf32>
    %69 = math.exp %68 : vector<8x8xf32>
    %cst_30 = arith.constant dense<0.000000e+00> : vector<8xf32>
    %70 = vector.multi_reduction <add>, %69, %cst_30 [1] : vector<8x8xf32> to vector<8xf32>
    %71 = vector.shape_cast %70 : vector<8xf32> to vector<8x1xf32>
    %72 = tpu.reciprocal %71 {approx = true} : vector<8x1xf32> -> vector<8x1xf32>
    %73 = vector.broadcast %72 : vector<8x1xf32> to vector<8x8xf32>
    %74 = arith.mulf %69, %73 : vector<8x8xf32>
    %75 = arith.truncf %74 : vector<8x8xf32> to vector<8x8xbf16>
    %cst_31 = arith.constant dense<0.000000e+00> : vector<8x32xf32>
    %76 = tpu.matmul %75, %60, %cst_31 {dimension_numbers = #tpu.dot_dimension_numbers<[1], [0], [0], [1], [0, 0, 1, 1], [], []>} : vector<8x8xbf16>, vector<8x32xbf16>, vector<8x32xf32> -> vector<8x32xf32>
    %77 = arith.truncf %76 : vector<8x32xf32> to vector<8x32xbf16>
    %c8 = arith.constant 8 : index
    %c0_32 = arith.constant 0 : index
    %78 = vector.load %arg8[%c8, %c0_32] : memref<16x64xbf16, #tpu.memory_space<vmem>>, vector<8x32xbf16>
    tpu.vector_store %arg8[%c8, %c0_32], %77 {strides = array<i32>} : memref<16x64xbf16, #tpu.memory_space<vmem>>, vector<8x32xbf16>,
    %79 = vector.extract_strided_slice %17 {offsets = [8, 32], sizes = [8, 32], strides = [1, 1]} : vector<16x128xbf16> to vector<8x32xbf16>
    %80 = vector.extract_strided_slice %17 {offsets = [8, 96], sizes = [8, 32], strides = [1, 1]} : vector<16x128xbf16> to vector<8x32xbf16>
    %81 = vector.extract_strided_slice %18 {offsets = [8, 32], sizes = [8, 32], strides = [1, 1]} : vector<16x64xbf16> to vector<8x32xbf16>
    %cst_33 = arith.constant dense<0.000000e+00> : vector<8x8xf32>
    %82 = tpu.matmul %79, %81, %cst_33 {dimension_numbers = #tpu.dot_dimension_numbers<[1], [1], [0], [0], [0, 0, 1, 0], [], []>} : vector<8x32xbf16>, vector<8x32xbf16>, vector<8x8xf32> -> vector<8x8xf32>
    %cst_34 = arith.constant 0.176776692 : f32
    %83 = vector.broadcast %cst_34 : f32 to vector<8x8xf32>
    %84 = arith.mulf %82, %83 : vector<8x8xf32>
    %cst_35 = arith.constant dense<0xFF800000> : vector<8xf32>
    %85 = vector.multi_reduction <maximumf>, %84, %cst_35 [1] : vector<8x8xf32> to vector<8xf32>
    %86 = vector.shape_cast %85 : vector<8xf32> to vector<8x1xf32>
    %87 = vector.broadcast %86 : vector<8x1xf32> to vector<8x8xf32>
    %88 = arith.subf %84, %87 : vector<8x8xf32>
    %89 = math.exp %88 : vector<8x8xf32>
    %cst_36 = arith.constant dense<0.000000e+00> : vector<8xf32>
    %90 = vector.multi_reduction <add>, %89, %cst_36 [1] : vector<8x8xf32> to vector<8xf32>
    %91 = vector.shape_cast %90 : vector<8xf32> to vector<8x1xf32>
    %92 = tpu.reciprocal %91 {approx = true} : vector<8x1xf32> -> vector<8x1xf32>
    %93 = vector.broadcast %92 : vector<8x1xf32> to vector<8x8xf32>
    %94 = arith.mulf %89, %93 : vector<8x8xf32>
    %95 = arith.truncf %94 : vector<8x8xf32> to vector<8x8xbf16>
    %cst_37 = arith.constant dense<0.000000e+00> : vector<8x32xf32>
    %96 = tpu.matmul %95, %80, %cst_37 {dimension_numbers = #tpu.dot_dimension_numbers<[1], [0], [0], [1], [0, 0, 1, 1], [], []>} : vector<8x8xbf16>, vector<8x32xbf16>, vector<8x32xf32> -> vector<8x32xf32>
    %97 = arith.truncf %96 : vector<8x32xf32> to vector<8x32xbf16>
    %c8_38 = arith.constant 8 : index
    %c32_39 = arith.constant 32 : index
    %98 = vector.load %arg8[%c8_38, %c32_39] : memref<16x64xbf16, #tpu.memory_space<vmem>>, vector<8x32xbf16>
    tpu.vector_store %arg8[%c8_38, %c32_39], %97 {strides = array<i32>} : memref<16x64xbf16, #tpu.memory_space<vmem>>, vector<8x32xbf16>,
    %c0_40 = arith.constant 0 : index
    %c0_41 = arith.constant 0 : index
    %99 = vector.load %arg8[%c0_40, %c0_41] : memref<16x64xbf16, #tpu.memory_space<vmem>>, vector<16x64xbf16>
    %c0_42 = arith.constant 0 : index
    %c0_43 = arith.constant 0 : index
    %100 = vector.load %arg5[%c0_42, %c0_43] : memref<64x32xbf16, #tpu.memory_space<vmem>>, vector<64x32xbf16>
    %cst_44 = arith.constant dense<0.000000e+00> : vector<16x32xf32>
    %101 = tpu.matmul %99, %100, %cst_44 {dimension_numbers = #tpu.dot_dimension_numbers<[1], [0], [0], [1], [0, 0, 1, 1], [], []>} : vector<16x64xbf16>, vector<64x32xbf16>, vector<16x32xf32> -> vector<16x32xf32>
    %102 = vector.broadcast %2 : vector<1x32xf32> to vector<16x32xf32>
    %103 = arith.addf %101, %102 : vector<16x32xf32>
    %c0_45 = arith.constant 0 : index
    %c0_46 = arith.constant 0 : index
    %c0_47 = arith.constant 0 : index
    %104 = vector.load %arg7[%c0_45, %c0_46, %c0_47] : memref<1x16x32xf32, #tpu.memory_space<vmem>>, vector<1x16x32xf32>
    %105 = vector.shape_cast %104 : vector<1x16x32xf32> to vector<16x32xf32>
    %106 = vector.shape_cast %103 : vector<16x32xf32> to vector<1x16x32xf32>
    tpu.vector_store %arg7[%c0_45, %c0_46, %c0_47], %106 {strides = array<i32>} : memref<1x16x32xf32, #tpu.memory_space<vmem>>, vector<1x16x32xf32>,
    return
  }
  func.func @transform_0(%arg0: i32) -> (i32, i32, i32) {
    %c0_i32 = arith.constant 0 : i32
    %c0_i32_0 = arith.constant 0 : i32
    %c0_i32_1 = arith.constant 0 : i32
    return %arg0, %c0_i32, %c0_i32_0 : i32, i32, i32
  }
  func.func @transform_1(%arg0: i32) -> (i32, i32, i32) {
    %c0_i32 = arith.constant 0 : i32
    %c0_i32_0 = arith.constant 0 : i32
    %c0_i32_1 = arith.constant 0 : i32
    return %arg0, %c0_i32, %c0_i32_0 : i32, i32, i32
  }
  func.func @transform_2(%arg0: i32) -> (i32, i32) {
    %c0_i32 = arith.constant 0 : i32
    %c0_i32_0 = arith.constant 0 : i32
    %c0_i32_1 = arith.constant 0 : i32
    return %c0_i32, %c0_i32_0 : i32, i32
  }
  func.func @transform_3(%arg0: i32) -> (i32, i32) {
    %c0_i32 = arith.constant 0 : i32
    %c0_i32_0 = arith.constant 0 : i32
    %c0_i32_1 = arith.constant 0 : i32
    return %c0_i32, %c0_i32_0 : i32, i32
  }
  func.func @transform_4(%arg0: i32) -> (i32, i32) {
    %c0_i32 = arith.constant 0 : i32
    %c0_i32_0 = arith.constant 0 : i32
    %c0_i32_1 = arith.constant 0 : i32
    return %c0_i32, %c0_i32_0 : i32, i32
  }
  func.func @transform_5(%arg0: i32) -> (i32, i32) {
    %c0_i32 = arith.constant 0 : i32
    %c0_i32_0 = arith.constant 0 : i32
    %c0_i32_1 = arith.constant 0 : i32
    return %c0_i32, %c0_i32_0 : i32, i32
  }
  func.func @transform_6(%arg0: i32) -> (i32, i32, i32) {
    %c0_i32 = arith.constant 0 : i32
    %c0_i32_0 = arith.constant 0 : i32
    %c0_i32_1 = arith.constant 0 : i32
    return %arg0, %c0_i32, %c0_i32_0 : i32, i32, i32
  }
}

</mosaic_0001>

<llo_original>
// kernel: tpu_custom_call.1
$region0: #{tpu_custom_call.1}
  #allocation0 [shape = 'u32[]', space=smem, size = 0x4, offset = 0x4, fixed_abs, tag = 'smem constant byte address 0x4 - core index']
  #allocation1 [shape = 'u32[144,128]{1,0:T(1,128)}', space=vmem, size = 0x12000, scoped, tag = 'internal scratch']
  #allocation2 [shape = 'bf16[16,64]{1,0:T(16,128)(2,1)}', space=vmem, size = 0x1000, scoped, tag = 'scratch operand']
  %s0 = inlined_call_operand.vmem [shape: f32[1,16,32], index: 0, kind: input, shape index: {}]
  %s1 = inlined_call_operand.vmem [shape: f32[1,16,32], index: 1, kind: input, shape index: {}]
  %s2 = inlined_call_operand.vmem [shape: bf16[32,128], index: 2, kind: input, shape index: {}]
  %s3 = inlined_call_operand.hbm [shape: bf16[32,64], index: 3, kind: input, shape index: {}]
  %s4 = inlined_call_operand.vmem [shape: bf16[64,32], index: 4, kind: input, shape index: {}]
  %s5 = inlined_call_operand.vmem [shape: f32[1,224], index: 5, kind: input, shape index: {}]
  %s6 = inlined_call_operand.hbm [shape: f32[1,16,32], index: 6, kind: output, shape index: {}]
  %s7 = sld [smem:[#allocation0]]
  $region38: #{tpu_custom_call.1} parent=0
    _
  %s9 = ssub.s32 1, %s7
  %s10 = scalar_select 0, %s9, %s7
  $region1: #{tpu_custom_call.1} parent=0
    #allocation3 [shape = 'u8[8192]{0}', space=vmem, size = 0x2000, scoped, tag = 'input window, operand 3, single buffered']
    #allocation4 [shape = 's32[1]{0}', space=sflag, size = 0x4, scoped, tag = 'scoped memory for tpu_custom_call.1']
    #allocation5 [shape = 's32[1]{0}', space=sflag, size = 0x4, scoped, tag = 'scoped memory for tpu_custom_call.1']
    #allocation6 [shape = 'u8[8192]{0}', space=vmem, size = 0x2000, scoped, tag = 'output window, operand 0, single buffered']
    %11 = vsyncpa [#allocation4], 0
    %12 = vsyncpa [#allocation5], 0
    // Predicated region
    $region2: #{tpu_custom_call.1} parent=1 // pred_check
      _
    $region3: #{tpu_custom_call.1} parent=1 // pred_check_branch
      %14 = sbr.rel (0) target = $region5
    $region4: #{tpu_custom_call.1} parent=1 // pred_region
      _
    $region5: #{tpu_custom_call.1} parent=1 // pred_fallthru
      _
    // Predicated region
    $region6: #{tpu_custom_call.1} parent=1 // pred_check
      _
    $region7: #{tpu_custom_call.1} parent=1 // pred_check_branch
      %16 = sbr.rel (0) target = $region9
    $region8: #{tpu_custom_call.1} parent=1 // pred_region
      _
    $region9: #{tpu_custom_call.1} parent=1 // pred_fallthru
      _
    // Predicated region
    $region10: #{tpu_custom_call.1} parent=1 // pred_check
      _
    $region11: #{tpu_custom_call.1} parent=1 // pred_check_branch
      %18 = sbr.rel (0) target = $region13
    $region12: #{tpu_custom_call.1} parent=1 // pred_region
      _
    $region13: #{tpu_custom_call.1} parent=1 // pred_fallthru
      _
    // Predicated region
    $region14: #{tpu_custom_call.1} parent=1 // pred_check
      _
    $region15: #{tpu_custom_call.1} parent=1 // pred_check_branch
      %20 = sbr.rel (0) target = $region17
    $region16: #{tpu_custom_call.1} parent=1 // pred_region
      %s22 = ssub.s32 256, 256
      %23 = vsyncadd [#allocation4], %s22
      %s24 = sshll.u32 [#allocation3], 4
      %s25 = int_to_ptr.vmem [resolvable:$true] %s24
      %30 = dma.hbm_to_vmem [thread:$0]  %s3, 256, %s25, [#allocation4], 64, 64, 4
    $region17: #{tpu_custom_call.1} parent=1 // pred_fallthru
      _
    // Predicated region
    $region18: #{tpu_custom_call.1} parent=1 // pred_check
      _
    $region19: #{tpu_custom_call.1} parent=1 // pred_check_branch
      %32 = sbr.rel (0) target = $region21
    $region20: #{tpu_custom_call.1} parent=1 // pred_region
      _
    $region21: #{tpu_custom_call.1} parent=1 // pred_fallthru
      _
    // Predicated region
    $region22: #{tpu_custom_call.1} parent=1 // pred_check
      _
    $region23: #{tpu_custom_call.1} parent=1 // pred_check_branch
      %34 = sbr.rel (0) target = $region25
    $region24: #{tpu_custom_call.1} parent=1 // pred_region
      _
    $region25: #{tpu_custom_call.1} parent=1 // pred_fallthru
      _
    // Predicated region
    $region26: #{tpu_custom_call.1} parent=1 // pred_check
      _
    $region27: #{tpu_custom_call.1} parent=1 // pred_check_branch
      %36 = sbr.rel (0) target = $region29
    $region28: #{tpu_custom_call.1} parent=1 // pred_region
      %37 = dma.done [#allocation4], 256
    $region29: #{tpu_custom_call.1} parent=1 // pred_fallthru
      _
    %v39 = vld [vmem:[%s5] sm:$0x1]
    %v40 = vld [vmem:[%s5 + $0x1] sm:$0x1]
    %v41 = vld [vmem:[%s0] sm:$0xff]
    %v42 = vld [vmem:[%s0 + $0x8] sm:$0xff]
    %v43 = vpack.c.bf16 %v42, %v41
    %v44 = vld [vmem:[%s2] sm:$0xf]
    %v45 = vld [vmem:[%s2 + $0x4] sm:$0xf]
    %v46 = vld [vmem:[%s2 + $0x8] sm:$0xf]
    %v47 = vld [vmem:[%s2 + $0xc] sm:$0xf]
    %v49 = vlaneseq
    %v50 = vshrl.u32 %v49, 7
    %v51 = vsub.s32 0, %v50
    %v52 = vrot.slane %v39, %v51
    %v58 = vunpack.c.l.b16 %v44
    %v59 = vunpack.c.l.b16 %v45
    %v60 = vunpack.c.l.b16 %v46
    %v61 = vunpack.c.l.b16 %v47
    %v62 = vpack.c.b16 %v59, %v58
    %v63 = vpack.c.b16 %v61, %v60
    %vm66 = vcmask 261120
    %v68 = vsel %vm66, %v43, 0
    %70 = vmatprep.subr.bf16.mxu0 0
    %71 = vmatpush1.bf16.msra.mxu0 %v62
    %72 = vmatprep.subr.bf16.mxu0 0
    %73 = vmatpush1.bf16.msra.mxu0 %v63
    %74 = vmatprep.subr.bf16.mxu0 0
    %75 = vmatpush1.bf16.msra.mxu0 0
    %76 = vmatprep.subr.bf16.mxu0 0
    %77 = vmatpush1.bf16.msra.mxu0 0
    %78 = vmatprep.subr.bf16.mxu0 0
    %79 = vmatpush1.bf16.msra.mxu0 0
    %80 = vmatprep.subr.bf16.mxu0 0
    %81 = vmatpush1.bf16.msra.mxu0 0
    %82 = vmatprep.subr.bf16.mxu0 0
    %83 = vmatpush1.bf16.msra.mxu0 0
    %84 = vmatprep.subr.bf16.mxu0 0
    %85 = vmatpush1.bf16.msra.mxu0 0
    %86 = vmatprep.subr.bf16.mxu0 0
    %87 = vmatpush1.bf16.msra.mxu0 0
    %88 = vmatprep.subr.bf16.mxu0 0
    %89 = vmatpush1.bf16.msra.mxu0 0
    %90 = vmatprep.subr.bf16.mxu0 0
    %91 = vmatpush1.bf16.msra.mxu0 0
    %92 = vmatprep.subr.bf16.mxu0 0
    %93 = vmatpush1.bf16.msra.mxu0 0
    %94 = vmatprep.subr.bf16.mxu0 0
    %95 = vmatpush1.bf16.msra.mxu0 0
    %96 = vmatprep.subr.bf16.mxu0 0
    %97 = vmatpush1.bf16.msra.mxu0 0
    %98 = vmatprep.subr.bf16.mxu0 0
    %99 = vmatpush1.bf16.msra.mxu0 0
    %100 = vmatprep.subr.bf16.mxu0 0
    %101 = vmatpush1.bf16.msra.mxu0 0
    %102 = vmatprep.mubr.bf16.mxu0 0
    %103 = vmatmul.mubr.bf16.gmra.mrb[0].mxu0 %v68
    %v104 = vpop.f32.mrb[0].mxu0
    %v105 = vadd.f32 %v52, %v104
    %v106 = vpop.f32.mrb[0].mxu0
    %v107 = vpop.f32.mrb[0].mxu0
    %v108 = vadd.f32 %v52, %v107
    %v109 = vpop.f32.mrb[0].mxu0
    %110 = vdwg.mxu0
    %v111 = vld [vmem:[%s1] sm:$0xff]
    %v112 = vld [vmem:[%s1 + $0x8] sm:$0xff]
    %v113 = vpack.c.bf16 %v112, %v111
    %v114 = vld [vmem:[#allocation3] sm:$0xf]
    %v115 = vld [vmem:[#allocation3 + $0x4] sm:$0xf]
    %v116 = vld [vmem:[#allocation3 + $0x8] sm:$0xf]
    %v117 = vld [vmem:[#allocation3 + $0xc] sm:$0xf]
    %v119 = vlaneseq
    %v120 = vshrl.u32 %v119, 7
    %v121 = vsub.s32 0, %v120
    %v122 = vrot.slane %v40, %v121
    %v128 = vunpack.c.l.b16 %v114
    %v129 = vunpack.c.l.b16 %v115
    %v130 = vunpack.c.l.b16 %v116
    %v131 = vunpack.c.l.b16 %v117
    %v132 = vpack.c.b16 %v129, %v128
    %v133 = vpack.c.b16 %v131, %v130
    %v137 = vsel %vm66, %v113, 0
    %139 = vmatprep.subr.bf16.mxu0 0
    %140 = vmatpush1.bf16.msra.mxu0 %v132
    %141 = vmatprep.subr.bf16.mxu0 0
    %142 = vmatpush1.bf16.msra.mxu0 %v133
    %143 = vmatprep.subr.bf16.mxu0 0
    %144 = vmatpush1.bf16.msra.mxu0 0
    %145 = vmatprep.subr.bf16.mxu0 0
    %146 = vmatpush1.bf16.msra.mxu0 0
    %147 = vmatprep.subr.bf16.mxu0 0
    %148 = vmatpush1.bf16.msra.mxu0 0
    %149 = vmatprep.subr.bf16.mxu0 0
    %150 = vmatpush1.bf16.msra.mxu0 0
    %151 = vmatprep.subr.bf16.mxu0 0
    %152 = vmatpush1.bf16.msra.mxu0 0
    %153 = vmatprep.subr.bf16.mxu0 0
    %154 = vmatpush1.bf16.msra.mxu0 0
    %155 = vmatprep.subr.bf16.mxu0 0
    %156 = vmatpush1.bf16.msra.mxu0 0
    %157 = vmatprep.subr.bf16.mxu0 0
    %158 = vmatpush1.bf16.msra.mxu0 0
    %159 = vmatprep.subr.bf16.mxu0 0
    %160 = vmatpush1.bf16.msra.mxu0 0
    %161 = vmatprep.subr.bf16.mxu0 0
    %162 = vmatpush1.bf16.msra.mxu0 0
    %163 = vmatprep.subr.bf16.mxu0 0
    %164 = vmatpush1.bf16.msra.mxu0 0
    %165 = vmatprep.subr.bf16.mxu0 0
    %166 = vmatpush1.bf16.msra.mxu0 0
    %167 = vmatprep.subr.bf16.mxu0 0
    %168 = vmatpush1.bf16.msra.mxu0 0
    %169 = vmatprep.subr.bf16.mxu0 0
    %170 = vmatpush1.bf16.msra.mxu0 0
    %171 = vmatprep.mubr.bf16.mxu0 0
    %172 = vmatmul.mubr.bf16.gmra.mrb[0].mxu0 %v137
    %v173 = vpop.f32.mrb[0].mxu0
    %v174 = vadd.f32 %v122, %v173
    %v175 = vpop.f32.mrb[0].mxu0
    %v176 = vpop.f32.mrb[0].mxu0
    %v177 = vadd.f32 %v122, %v176
    %v178 = vpop.f32.mrb[0].mxu0
    %179 = vdwg.mxu0
    %v180 = vpack.c.bf16 %v108, %v105
    %v181 = vpack.c.bf16 %v177, %v174
    %v183 = vsel %vm66, %v180, 0
    %v186 = vsel %vm66, %v181, 0
    %188 = vmatprep.subr.bf16.mxu0 0
    %189 = vmatpush1.bf16.xpose.msra.mxu0 %v186
    %190 = vmatprep.subr.bf16.mxu0 0
    %191 = vmatpush1.bf16.xpose.msra.mxu0 0
    %192 = vmatprep.subr.bf16.mxu0 0
    %193 = vmatpush1.bf16.xpose.msra.mxu0 0
    %194 = vmatprep.subr.bf16.mxu0 0
    %195 = vmatpush1.bf16.xpose.msra.mxu0 0
    %196 = vmatprep.subr.bf16.mxu0 0
    %197 = vmatpush1.bf16.xpose.msra.mxu0 0
    %198 = vmatprep.subr.bf16.mxu0 0
    %199 = vmatpush1.bf16.xpose.msra.mxu0 0
    %200 = vmatprep.subr.bf16.mxu0 0
    %201 = vmatpush1.bf16.xpose.msra.mxu0 0
    %202 = vmatprep.subr.bf16.mxu0 0
    %203 = vmatpush1.bf16.xpose.msra.mxu0 0
    %204 = vmatprep.subr.bf16.mxu0 0
    %205 = vmatpush1.bf16.xpose.msra.mxu0 0
    %206 = vmatprep.subr.bf16.mxu0 0
    %207 = vmatpush1.bf16.xpose.msra.mxu0 0
    %208 = vmatprep.subr.bf16.mxu0 0
    %209 = vmatpush1.bf16.xpose.msra.mxu0 0
    %210 = vmatprep.subr.bf16.mxu0 0
    %211 = vmatpush1.bf16.xpose.msra.mxu0 0
    %212 = vmatprep.subr.bf16.mxu0 0
    %213 = vmatpush1.bf16.xpose.msra.mxu0 0
    %214 = vmatprep.subr.bf16.mxu0 0
    %215 = vmatpush1.bf16.xpose.msra.mxu0 0
    %216 = vmatprep.subr.bf16.mxu0 0
    %217 = vmatpush1.bf16.xpose.msra.mxu0 0
    %218 = vmatprep.subr.bf16.mxu0 0
    %219 = vmatpush1.bf16.xpose.msra.mxu0 0
    %220 = vmatprep.mubr.bf16.mxu0 0
    %221 = vmatmul.mubr.bf16.gmra.mrb[0].mxu0 %v183
    %v222 = vpop.f32.mrb[0].mxu0
    %v223 = vadd.f32 0.0, %v222
    %v224 = vpop.f32.mrb[0].mxu0
    %v225 = vpop.f32.mrb[0].mxu0
    %v226 = vpop.f32.mrb[0].mxu0
    %227 = vdwg.mxu0
    %v228 = vmul.f32 %v223, 0.17677669
    %vm229 = vcmask 64512
    %v230 = vsel %vm229, %v228, -inf
    %231 = vmax.xlane.f32.xlu0 %v230
    %v232 = vpop.xlane.xlu0 %231
    %v233 = vsub.f32 %v228, %v232
    %v234 = vmul.f32 %v233, 1.442695
    %v235 = vpow.pop %v234
    %v236 = vsel %vm229, %v235, 0.0
    %237 = vadd.xlane.f32.xlu0 %v236
    %v238 = vpop.xlane.xlu0 %237
    %v239 = vrcp.pop %v238
    %v240 = vmul.f32 %v235, %v239
    %v241 = vpack.c.bf16 %v240, %v240
    %243 = vrot.lane.b32.xlu0 %v180, 64
    %v244 = vpop.permute.xlu0 %243
    %v246 = vsel %vm229, %v241, 0
    %vm248 = vcmask 1043456
    %v250 = vsel %vm248, %v244, 0
    %252 = vmatprep.subr.bf16.mxu0 0
    %253 = vmatpush1.bf16.msra.mxu0 %v250
    %254 = vmatprep.subr.bf16.mxu0 0
    %255 = vmatpush1.bf16.msra.mxu0 0
    %256 = vmatprep.subr.bf16.mxu0 0
    %257 = vmatpush1.bf16.msra.mxu0 0
    %258 = vmatprep.subr.bf16.mxu0 0
    %259 = vmatpush1.bf16.msra.mxu0 0
    %260 = vmatprep.subr.bf16.mxu0 0
    %261 = vmatpush1.bf16.msra.mxu0 0
    %262 = vmatprep.subr.bf16.mxu0 0
    %263 = vmatpush1.bf16.msra.mxu0 0
    %264 = vmatprep.subr.bf16.mxu0 0
    %265 = vmatpush1.bf16.msra.mxu0 0
    %266 = vmatprep.subr.bf16.mxu0 0
    %267 = vmatpush1.bf16.msra.mxu0 0
    %268 = vmatprep.subr.bf16.mxu0 0
    %269 = vmatpush1.bf16.msra.mxu0 0
    %270 = vmatprep.subr.bf16.mxu0 0
    %271 = vmatpush1.bf16.msra.mxu0 0
    %272 = vmatprep.subr.bf16.mxu0 0
    %273 = vmatpush1.bf16.msra.mxu0 0
    %274 = vmatprep.subr.bf16.mxu0 0
    %275 = vmatpush1.bf16.msra.mxu0 0
    %276 = vmatprep.subr.bf16.mxu0 0
    %277 = vmatpush1.bf16.msra.mxu0 0
    %278 = vmatprep.subr.bf16.mxu0 0
    %279 = vmatpush1.bf16.msra.mxu0 0
    %280 = vmatprep.subr.bf16.mxu0 0
    %281 = vmatpush1.bf16.msra.mxu0 0
    %282 = vmatprep.subr.bf16.mxu0 0
    %283 = vmatpush1.bf16.msra.mxu0 0
    %284 = vmatprep.mubr.bf16.mxu0 0
    %285 = vmatmul.mubr.bf16.gmra.mrb[0].mxu0 %v246
    %v286 = vpop.f32.mrb[0].mxu0
    %v287 = vadd.f32 0.0, %v286
    %v288 = vpop.f32.mrb[0].mxu0
    %v289 = vpop.f32.mrb[0].mxu0
    %v290 = vpop.f32.mrb[0].mxu0
    %291 = vdwg.mxu0
    %v292 = vpack.c.bf16 %v287, %v287
    %vm293 = vcmask 257024
    %294 = vst.msk [vmem:[#allocation2] sm:$0xf] %vm293, %v292
    %295 = vrot.lane.b32.xlu0 %v180, 96
    %v296 = vpop.permute.xlu0 %295
    %298 = vrot.lane.b32.xlu0 %v181, 96
    %v299 = vpop.permute.xlu0 %298
    %v301 = vsel %vm66, %v296, 0
    %v304 = vsel %vm66, %v299, 0
    %306 = vmatprep.subr.bf16.mxu0 0
    %307 = vmatpush1.bf16.xpose.msra.mxu0 %v304
    %308 = vmatprep.subr.bf16.mxu0 0
    %309 = vmatpush1.bf16.xpose.msra.mxu0 0
    %310 = vmatprep.subr.bf16.mxu0 0
    %311 = vmatpush1.bf16.xpose.msra.mxu0 0
    %312 = vmatprep.subr.bf16.mxu0 0
    %313 = vmatpush1.bf16.xpose.msra.mxu0 0
    %314 = vmatprep.subr.bf16.mxu0 0
    %315 = vmatpush1.bf16.xpose.msra.mxu0 0
    %316 = vmatprep.subr.bf16.mxu0 0
    %317 = vmatpush1.bf16.xpose.msra.mxu0 0
    %318 = vmatprep.subr.bf16.mxu0 0
    %319 = vmatpush1.bf16.xpose.msra.mxu0 0
    %320 = vmatprep.subr.bf16.mxu0 0
    %321 = vmatpush1.bf16.xpose.msra.mxu0 0
    %322 = vmatprep.subr.bf16.mxu0 0
    %323 = vmatpush1.bf16.xpose.msra.mxu0 0
    %324 = vmatprep.subr.bf16.mxu0 0
    %325 = vmatpush1.bf16.xpose.msra.mxu0 0
    %326 = vmatprep.subr.bf16.mxu0 0
    %327 = vmatpush1.bf16.xpose.msra.mxu0 0
    %328 = vmatprep.subr.bf16.mxu0 0
    %329 = vmatpush1.bf16.xpose.msra.mxu0 0
    %330 = vmatprep.subr.bf16.mxu0 0
    %331 = vmatpush1.bf16.xpose.msra.mxu0 0
    %332 = vmatprep.subr.bf16.mxu0 0
    %333 = vmatpush1.bf16.xpose.msra.mxu0 0
    %334 = vmatprep.subr.bf16.mxu0 0
    %335 = vmatpush1.bf16.xpose.msra.mxu0 0
    %336 = vmatprep.subr.bf16.mxu0 0
    %337 = vmatpush1.bf16.xpose.msra.mxu0 0
    %338 = vmatprep.mubr.bf16.mxu0 0
    %339 = vmatmul.mubr.bf16.gmra.mrb[0].mxu0 %v301
    %v340 = vpop.f32.mrb[0].mxu0
    %v341 = vadd.f32 0.0, %v340
    %v342 = vpop.f32.mrb[0].mxu0
    %v343 = vpop.f32.mrb[0].mxu0
    %v344 = vpop.f32.mrb[0].mxu0
    %345 = vdwg.mxu0
    %v346 = vmul.f32 %v341, 0.17677669
    %v347 = vsel %vm229, %v346, -inf
    %348 = vmax.xlane.f32.xlu0 %v347
    %v349 = vpop.xlane.xlu0 %348
    %v350 = vsub.f32 %v346, %v349
    %v351 = vmul.f32 %v350, 1.442695
    %v352 = vpow.pop %v351
    %v353 = vsel %vm229, %v352, 0.0
    %354 = vadd.xlane.f32.xlu0 %v353
    %v355 = vpop.xlane.xlu0 %354
    %v356 = vrcp.pop %v355
    %v357 = vmul.f32 %v352, %v356
    %v358 = vpack.c.bf16 %v357, %v357
    %359 = vrot.lane.b32.xlu0 %v180, 32
    %v360 = vpop.permute.xlu0 %359
    %v362 = vsel %vm229, %v358, 0
    %v365 = vsel %vm248, %v360, 0
    %367 = vmatprep.subr.bf16.mxu0 0
    %368 = vmatpush1.bf16.msra.mxu0 %v365
    %369 = vmatprep.subr.bf16.mxu0 0
    %370 = vmatpush1.bf16.msra.mxu0 0
    %371 = vmatprep.subr.bf16.mxu0 0
    %372 = vmatpush1.bf16.msra.mxu0 0
    %373 = vmatprep.subr.bf16.mxu0 0
    %374 = vmatpush1.bf16.msra.mxu0 0
    %375 = vmatprep.subr.bf16.mxu0 0
    %376 = vmatpush1.bf16.msra.mxu0 0
    %377 = vmatprep.subr.bf16.mxu0 0
    %378 = vmatpush1.bf16.msra.mxu0 0
    %379 = vmatprep.subr.bf16.mxu0 0
    %380 = vmatpush1.bf16.msra.mxu0 0
    %381 = vmatprep.subr.bf16.mxu0 0
    %382 = vmatpush1.bf16.msra.mxu0 0
    %383 = vmatprep.subr.bf16.mxu0 0
    %384 = vmatpush1.bf16.msra.mxu0 0
    %385 = vmatprep.subr.bf16.mxu0 0
    %386 = vmatpush1.bf16.msra.mxu0 0
    %387 = vmatprep.subr.bf16.mxu0 0
    %388 = vmatpush1.bf16.msra.mxu0 0
    %389 = vmatprep.subr.bf16.mxu0 0
    %390 = vmatpush1.bf16.msra.mxu0 0
    %391 = vmatprep.subr.bf16.mxu0 0
    %392 = vmatpush1.bf16.msra.mxu0 0
    %393 = vmatprep.subr.bf16.mxu0 0
    %394 = vmatpush1.bf16.msra.mxu0 0
    %395 = vmatprep.subr.bf16.mxu0 0
    %396 = vmatpush1.bf16.msra.mxu0 0
    %397 = vmatprep.subr.bf16.mxu0 0
    %398 = vmatpush1.bf16.msra.mxu0 0
    %399 = vmatprep.mubr.bf16.mxu0 0
    %400 = vmatmul.mubr.bf16.gmra.mrb[0].mxu0 %v362
    %v401 = vpop.f32.mrb[0].mxu0
    %v402 = vadd.f32 0.0, %v401
    %v403 = vpop.f32.mrb[0].mxu0
    %v404 = vpop.f32.mrb[0].mxu0
    %v405 = vpop.f32.mrb[0].mxu0
    %406 = vdwg.mxu0
    %v407 = vpack.c.bf16 %v402, %v402
    %409 = vrot.lane.b32.xlu0 %v407, 32
    %v410 = vpop.permute.xlu0 %409
    %vm412 = vcmask 519424
    %413 = vst.msk [vmem:[#allocation2] sm:$0xf] %vm412, %v410
    %v414 = vrot.slane %v180, 4
    %v415 = vrot.slane %v181, 4
    %v417 = vsel %vm66, %v414, 0
    %v420 = vsel %vm66, %v415, 0
    %422 = vmatprep.subr.bf16.mxu0 0
    %423 = vmatpush1.bf16.xpose.msra.mxu0 %v420
    %424 = vmatprep.subr.bf16.mxu0 0
    %425 = vmatpush1.bf16.xpose.msra.mxu0 0
    %426 = vmatprep.subr.bf16.mxu0 0
    %427 = vmatpush1.bf16.xpose.msra.mxu0 0
    %428 = vmatprep.subr.bf16.mxu0 0
    %429 = vmatpush1.bf16.xpose.msra.mxu0 0
    %430 = vmatprep.subr.bf16.mxu0 0
    %431 = vmatpush1.bf16.xpose.msra.mxu0 0
    %432 = vmatprep.subr.bf16.mxu0 0
    %433 = vmatpush1.bf16.xpose.msra.mxu0 0
    %434 = vmatprep.subr.bf16.mxu0 0
    %435 = vmatpush1.bf16.xpose.msra.mxu0 0
    %436 = vmatprep.subr.bf16.mxu0 0
    %437 = vmatpush1.bf16.xpose.msra.mxu0 0
    %438 = vmatprep.subr.bf16.mxu0 0
    %439 = vmatpush1.bf16.xpose.msra.mxu0 0
    %440 = vmatprep.subr.bf16.mxu0 0
    %441 = vmatpush1.bf16.xpose.msra.mxu0 0
    %442 = vmatprep.subr.bf16.mxu0 0
    %443 = vmatpush1.bf16.xpose.msra.mxu0 0
    %444 = vmatprep.subr.bf16.mxu0 0
    %445 = vmatpush1.bf16.xpose.msra.mxu0 0
    %446 = vmatprep.subr.bf16.mxu0 0
    %447 = vmatpush1.bf16.xpose.msra.mxu0 0
    %448 = vmatprep.subr.bf16.mxu0 0
    %449 = vmatpush1.bf16.xpose.msra.mxu0 0
    %450 = vmatprep.subr.bf16.mxu0 0
    %451 = vmatpush1.bf16.xpose.msra.mxu0 0
    %452 = vmatprep.subr.bf16.mxu0 0
    %453 = vmatpush1.bf16.xpose.msra.mxu0 0
    %454 = vmatprep.mubr.bf16.mxu0 0
    %455 = vmatmul.mubr.bf16.gmra.mrb[0].mxu0 %v417
    %v456 = vpop.f32.mrb[0].mxu0
    %v457 = vadd.f32 0.0, %v456
    %v458 = vpop.f32.mrb[0].mxu0
    %v459 = vpop.f32.mrb[0].mxu0
    %v460 = vpop.f32.mrb[0].mxu0
    %461 = vdwg.mxu0
    %v462 = vmul.f32 %v457, 0.17677669
    %v463 = vsel %vm229, %v462, -inf
    %464 = vmax.xlane.f32.xlu0 %v463
    %v465 = vpop.xlane.xlu0 %464
    %v466 = vsub.f32 %v462, %v465
    %v467 = vmul.f32 %v466, 1.442695
    %v468 = vpow.pop %v467
    %v469 = vsel %vm229, %v468, 0.0
    %470 = vadd.xlane.f32.xlu0 %v469
    %v471 = vpop.xlane.xlu0 %470
    %v472 = vrcp.pop %v471
    %v473 = vmul.f32 %v468, %v472
    %v474 = vpack.c.bf16 %v473, %v473
    %475 = vrot.lane.b32.xlu0 %v414, 64
    %v476 = vpop.permute.xlu0 %475
    %v478 = vsel %vm229, %v474, 0
    %v481 = vsel %vm248, %v476, 0
    %483 = vmatprep.subr.bf16.mxu0 0
    %484 = vmatpush1.bf16.msra.mxu0 %v481
    %485 = vmatprep.subr.bf16.mxu0 0
    %486 = vmatpush1.bf16.msra.mxu0 0
    %487 = vmatprep.subr.bf16.mxu0 0
    %488 = vmatpush1.bf16.msra.mxu0 0
    %489 = vmatprep.subr.bf16.mxu0 0
    %490 = vmatpush1.bf16.msra.mxu0 0
    %491 = vmatprep.subr.bf16.mxu0 0
    %492 = vmatpush1.bf16.msra.mxu0 0
    %493 = vmatprep.subr.bf16.mxu0 0
    %494 = vmatpush1.bf16.msra.mxu0 0
    %495 = vmatprep.subr.bf16.mxu0 0
    %496 = vmatpush1.bf16.msra.mxu0 0
    %497 = vmatprep.subr.bf16.mxu0 0
    %498 = vmatpush1.bf16.msra.mxu0 0
    %499 = vmatprep.subr.bf16.mxu0 0
    %500 = vmatpush1.bf16.msra.mxu0 0
    %501 = vmatprep.subr.bf16.mxu0 0
    %502 = vmatpush1.bf16.msra.mxu0 0
    %503 = vmatprep.subr.bf16.mxu0 0
    %504 = vmatpush1.bf16.msra.mxu0 0
    %505 = vmatprep.subr.bf16.mxu0 0
    %506 = vmatpush1.bf16.msra.mxu0 0
    %507 = vmatprep.subr.bf16.mxu0 0
    %508 = vmatpush1.bf16.msra.mxu0 0
    %509 = vmatprep.subr.bf16.mxu0 0
    %510 = vmatpush1.bf16.msra.mxu0 0
    %511 = vmatprep.subr.bf16.mxu0 0
    %512 = vmatpush1.bf16.msra.mxu0 0
    %513 = vmatprep.subr.bf16.mxu0 0
    %514 = vmatpush1.bf16.msra.mxu0 0
    %515 = vmatprep.mubr.bf16.mxu0 0
    %516 = vmatmul.mubr.bf16.gmra.mrb[0].mxu0 %v478
    %v517 = vpop.f32.mrb[0].mxu0
    %v518 = vadd.f32 0.0, %v517
    %v519 = vpop.f32.mrb[0].mxu0
    %v520 = vpop.f32.mrb[0].mxu0
    %v521 = vpop.f32.mrb[0].mxu0
    %522 = vdwg.mxu0
    %v523 = vpack.c.bf16 %v518, %v518
    %v525 = vrot.slane %v523, 4
    %vm527 = vcmask 261124
    %528 = vst.msk [vmem:[#allocation2] sm:$0xf0] %vm527, %v525
    %529 = vrot.lane.b32.xlu0 %v414, 96
    %v530 = vpop.permute.xlu0 %529
    %531 = vrot.lane.b32.xlu0 %v415, 96
    %v532 = vpop.permute.xlu0 %531
    %v534 = vsel %vm66, %v530, 0
    %v537 = vsel %vm66, %v532, 0
    %539 = vmatprep.subr.bf16.mxu0 0
    %540 = vmatpush1.bf16.xpose.msra.mxu0 %v537
    %541 = vmatprep.subr.bf16.mxu0 0
    %542 = vmatpush1.bf16.xpose.msra.mxu0 0
    %543 = vmatprep.subr.bf16.mxu0 0
    %544 = vmatpush1.bf16.xpose.msra.mxu0 0
    %545 = vmatprep.subr.bf16.mxu0 0
    %546 = vmatpush1.bf16.xpose.msra.mxu0 0
    %547 = vmatprep.subr.bf16.mxu0 0
    %548 = vmatpush1.bf16.xpose.msra.mxu0 0
    %549 = vmatprep.subr.bf16.mxu0 0
    %550 = vmatpush1.bf16.xpose.msra.mxu0 0
    %551 = vmatprep.subr.bf16.mxu0 0
    %552 = vmatpush1.bf16.xpose.msra.mxu0 0
    %553 = vmatprep.subr.bf16.mxu0 0
    %554 = vmatpush1.bf16.xpose.msra.mxu0 0
    %555 = vmatprep.subr.bf16.mxu0 0
    %556 = vmatpush1.bf16.xpose.msra.mxu0 0
    %557 = vmatprep.subr.bf16.mxu0 0
    %558 = vmatpush1.bf16.xpose.msra.mxu0 0
    %559 = vmatprep.subr.bf16.mxu0 0
    %560 = vmatpush1.bf16.xpose.msra.mxu0 0
    %561 = vmatprep.subr.bf16.mxu0 0
    %562 = vmatpush1.bf16.xpose.msra.mxu0 0
    %563 = vmatprep.subr.bf16.mxu0 0
    %564 = vmatpush1.bf16.xpose.msra.mxu0 0
    %565 = vmatprep.subr.bf16.mxu0 0
    %566 = vmatpush1.bf16.xpose.msra.mxu0 0
    %567 = vmatprep.subr.bf16.mxu0 0
    %568 = vmatpush1.bf16.xpose.msra.mxu0 0
    %569 = vmatprep.subr.bf16.mxu0 0
    %570 = vmatpush1.bf16.xpose.msra.mxu0 0
    %571 = vmatprep.mubr.bf16.mxu0 0
    %572 = vmatmul.mubr.bf16.gmra.mrb[0].mxu0 %v534
    %v573 = vpop.f32.mrb[0].mxu0
    %v574 = vadd.f32 0.0, %v573
    %v575 = vpop.f32.mrb[0].mxu0
    %v576 = vpop.f32.mrb[0].mxu0
    %v577 = vpop.f32.mrb[0].mxu0
    %578 = vdwg.mxu0
    %v579 = vmul.f32 %v574, 0.17677669
    %v580 = vsel %vm229, %v579, -inf
    %581 = vmax.xlane.f32.xlu0 %v580
    %v582 = vpop.xlane.xlu0 %581
    %v583 = vsub.f32 %v579, %v582
    %v584 = vmul.f32 %v583, 1.442695
    %v585 = vpow.pop %v584
    %v586 = vsel %vm229, %v585, 0.0
    %587 = vadd.xlane.f32.xlu0 %v586
    %v588 = vpop.xlane.xlu0 %587
    %v589 = vrcp.pop %v588
    %v590 = vmul.f32 %v585, %v589
    %v591 = vpack.c.bf16 %v590, %v590
    %592 = vrot.lane.b32.xlu0 %v414, 32
    %v593 = vpop.permute.xlu0 %592
    %v595 = vsel %vm229, %v591, 0
    %v598 = vsel %vm248, %v593, 0
    %600 = vmatprep.subr.bf16.mxu0 0
    %601 = vmatpush1.bf16.msra.mxu0 %v598
    %602 = vmatprep.subr.bf16.mxu0 0
    %603 = vmatpush1.bf16.msra.mxu0 0
    %604 = vmatprep.subr.bf16.mxu0 0
    %605 = vmatpush1.bf16.msra.mxu0 0
    %606 = vmatprep.subr.bf16.mxu0 0
    %607 = vmatpush1.bf16.msra.mxu0 0
    %608 = vmatprep.subr.bf16.mxu0 0
    %609 = vmatpush1.bf16.msra.mxu0 0
    %610 = vmatprep.subr.bf16.mxu0 0
    %611 = vmatpush1.bf16.msra.mxu0 0
    %612 = vmatprep.subr.bf16.mxu0 0
    %613 = vmatpush1.bf16.msra.mxu0 0
    %614 = vmatprep.subr.bf16.mxu0 0
    %615 = vmatpush1.bf16.msra.mxu0 0
    %616 = vmatprep.subr.bf16.mxu0 0
    %617 = vmatpush1.bf16.msra.mxu0 0
    %618 = vmatprep.subr.bf16.mxu0 0
    %619 = vmatpush1.bf16.msra.mxu0 0
    %620 = vmatprep.subr.bf16.mxu0 0
    %621 = vmatpush1.bf16.msra.mxu0 0
    %622 = vmatprep.subr.bf16.mxu0 0
    %623 = vmatpush1.bf16.msra.mxu0 0
    %624 = vmatprep.subr.bf16.mxu0 0
    %625 = vmatpush1.bf16.msra.mxu0 0
    %626 = vmatprep.subr.bf16.mxu0 0
    %627 = vmatpush1.bf16.msra.mxu0 0
    %628 = vmatprep.subr.bf16.mxu0 0
    %629 = vmatpush1.bf16.msra.mxu0 0
    %630 = vmatprep.subr.bf16.mxu0 0
    %631 = vmatpush1.bf16.msra.mxu0 0
    %632 = vmatprep.mubr.bf16.mxu0 0
    %633 = vmatmul.mubr.bf16.gmra.mrb[0].mxu0 %v595
    %v634 = vpop.f32.mrb[0].mxu0
    %v635 = vadd.f32 0.0, %v634
    %v636 = vpop.f32.mrb[0].mxu0
    %v637 = vpop.f32.mrb[0].mxu0
    %v638 = vpop.f32.mrb[0].mxu0
    %639 = vdwg.mxu0
    %v640 = vpack.c.bf16 %v635, %v635
    %v642 = vrot.slane %v640, 4
    %643 = vrot.lane.b32.xlu0 %v642, 32
    %v644 = vpop.permute.xlu0 %643
    %vm646 = vcmask 523524
    %647 = vst.msk [vmem:[#allocation2] sm:$0xf0] %vm646, %v644
    %v648 = vld [vmem:[#allocation2] sm:$0xff]
    %v649 = vld [vmem:[%s4] sm:$0xf]
    %v650 = vld [vmem:[%s4 + $0x4] sm:$0xf]
    %v651 = vld [vmem:[%s4 + $0x8] sm:$0xf]
    %v652 = vld [vmem:[%s4 + $0xc] sm:$0xf]
    %v653 = vld [vmem:[%s4 + $0x10] sm:$0xf]
    %v654 = vld [vmem:[%s4 + $0x14] sm:$0xf]
    %v655 = vld [vmem:[%s4 + $0x18] sm:$0xf]
    %v656 = vld [vmem:[%s4 + $0x1c] sm:$0xf]
    %v665 = vunpack.c.l.b16 %v649
    %v666 = vunpack.c.l.b16 %v650
    %v667 = vunpack.c.l.b16 %v651
    %v668 = vunpack.c.l.b16 %v652
    %v669 = vunpack.c.l.b16 %v653
    %v670 = vunpack.c.l.b16 %v654
    %v671 = vunpack.c.l.b16 %v655
    %v672 = vunpack.c.l.b16 %v656
    %v673 = vpack.c.b16 %v666, %v665
    %v674 = vpack.c.b16 %v668, %v667
    %v675 = vpack.c.b16 %v670, %v669
    %v676 = vpack.c.b16 %v672, %v671
    %681 = vrot.lane.b32.xlu0 %v122, 64
    %v682 = vpop.permute.xlu0 %681
    %vm684 = vcmask 523264
    %v686 = vsel %vm684, %v648, 0
    %688 = vmatprep.subr.bf16.mxu0 0
    %689 = vmatpush1.bf16.msra.mxu0 %v673
    %690 = vmatprep.subr.bf16.mxu0 0
    %691 = vmatpush1.bf16.msra.mxu0 %v674
    %692 = vmatprep.subr.bf16.mxu0 0
    %693 = vmatpush1.bf16.msra.mxu0 %v675
    %694 = vmatprep.subr.bf16.mxu0 0
    %695 = vmatpush1.bf16.msra.mxu0 %v676
    %696 = vmatprep.subr.bf16.mxu0 0
    %697 = vmatpush1.bf16.msra.mxu0 0
    %698 = vmatprep.subr.bf16.mxu0 0
    %699 = vmatpush1.bf16.msra.mxu0 0
    %700 = vmatprep.subr.bf16.mxu0 0
    %701 = vmatpush1.bf16.msra.mxu0 0
    %702 = vmatprep.subr.bf16.mxu0 0
    %703 = vmatpush1.bf16.msra.mxu0 0
    %704 = vmatprep.subr.bf16.mxu0 0
    %705 = vmatpush1.bf16.msra.mxu0 0
    %706 = vmatprep.subr.bf16.mxu0 0
    %707 = vmatpush1.bf16.msra.mxu0 0
    %708 = vmatprep.subr.bf16.mxu0 0
    %709 = vmatpush1.bf16.msra.mxu0 0
    %710 = vmatprep.subr.bf16.mxu0 0
    %711 = vmatpush1.bf16.msra.mxu0 0
    %712 = vmatprep.subr.bf16.mxu0 0
    %713 = vmatpush1.bf16.msra.mxu0 0
    %714 = vmatprep.subr.bf16.mxu0 0
    %715 = vmatpush1.bf16.msra.mxu0 0
    %716 = vmatprep.subr.bf16.mxu0 0
    %717 = vmatpush1.bf16.msra.mxu0 0
    %718 = vmatprep.subr.bf16.mxu0 0
    %719 = vmatpush1.bf16.msra.mxu0 0
    %720 = vmatprep.mubr.bf16.mxu0 0
    %721 = vmatmul.mubr.bf16.gmra.mrb[0].mxu0 %v686
    %v722 = vpop.f32.mrb[0].mxu0
    %v723 = vadd.f32 %v682, %v722
    %v724 = vpop.f32.mrb[0].mxu0
    %v725 = vpop.f32.mrb[0].mxu0
    %v726 = vadd.f32 %v682, %v725
    %v727 = vpop.f32.mrb[0].mxu0
    %728 = vdwg.mxu0
    %729 = vst.msk [vmem:[#allocation6] sm:$0xff] %vm66, %v723
    %730 = vst.msk [vmem:[#allocation6 + $0x8] sm:$0xff] %vm66, %v726
    // Predicated region
    $region30: #{tpu_custom_call.1} parent=1 // pred_check
      _
    $region31: #{tpu_custom_call.1} parent=1 // pred_check_branch
      %732 = sbr.rel (0) target = $region33
    $region32: #{tpu_custom_call.1} parent=1 // pred_region
      %s734 = ssub.s32 256, 256
      %735 = vsyncadd [#allocation5], %s734
      %s736 = sshll.u32 [#allocation6], 4
      %s737 = int_to_ptr.vmem [resolvable:$true] %s736
      %742 = dma.vmem_to_hbm [thread:$0]  %s737, 256, %s6, [#allocation5], 128, 128, 8
    $region33: #{tpu_custom_call.1} parent=1 // pred_fallthru
      _
    // Predicated region
    $region34: #{tpu_custom_call.1} parent=1 // pred_check
      _
    $region35: #{tpu_custom_call.1} parent=1 // pred_check_branch
      %744 = sbr.rel (0) target = $region37
    $region36: #{tpu_custom_call.1} parent=1 // pred_region
      %745 = dma.done [#allocation5], 256
    $region37: #{tpu_custom_call.1} parent=1 // pred_fallthru
      _
    %746 = vsyncpa [#allocation4], 1
    %747 = vsyncpa [#allocation5], 1

</llo_original>
